<compile_context>
chip_gen: v6e
topology: v6e:2x2x1
jax: 0.10.0
libtpu: 0.0.40
codegen_flags: <defaults>
</compile_context>

<pallas_src>
import jax
import jax.numpy as jnp
from jax.experimental import pallas as pl
from jax.experimental.pallas import tpu as pltpu


def dqn_kernel(xT_ref,
               w1_ref, b1_ref,
               w2_ref, b2_ref,
               w3_ref, b3_ref,
               w4_ref, b4_ref,
               out_ref):
    x = xT_ref[...]                                                   # (5, TB) bf16
    # Layer 1: (64, 5) @ (5, TB) -> (64, TB); f32 accumulate, f32 epilogue.
    h = jnp.dot(w1_ref[...], x, preferred_element_type=jnp.float32)
    h = jnp.maximum(h + b1_ref[...], 0.0)
    # Layer 2: (16, 64) @ (64, TB)
    h = jnp.dot(w2_ref[...], h.astype(jnp.bfloat16),
                preferred_element_type=jnp.float32)
    h = jnp.maximum(h + b2_ref[...], 0.0)
    # Layer 3: (8, 16) @ (16, TB)
    h = jnp.dot(w3_ref[...], h.astype(jnp.bfloat16),
                preferred_element_type=jnp.float32)
    h = jnp.maximum(h + b3_ref[...], 0.0)
    # Layer 4: Linear(8 -> 1) on the VPU/XLU: broadcast the (8, 1) weight column over
    # lanes, multiply, reduce the 8 sublanes. Lane-dense (1, TB) store.
    q = jnp.sum(h * w4_ref[...], axis=0, keepdims=True) + b4_ref[...]   # (1, TB)
    out_ref[...] = q.astype(out_ref.dtype)


def _round_up(n, m):
    return ((n + m - 1) // m) * m


def dqn_forward(x, params, *, tile_b=1024):
    """x: (B, input_dim) float32.
    params: PyTorch nn.Linear layout: w_i (out_features, in_features) f32, b_i (out_features,) f32.
    Returns (B, 1) float32, matching q_value.view(-1, 1)."""
    B, in_dim = x.shape

    # Batch tile: multiple of 256 (MXU / lane alignment), capped at tile_b.
    tb = min(tile_b, _round_up(max(B, 1), 256))
    b_pad = _round_up(B, tb)
    n_tiles = b_pad // tb

    # Feature-major activation stream, zero-padded to a tile multiple, bf16 for the MXU.
    xT = jnp.pad(x.T, ((0, 0), (0, b_pad - B))).astype(jnp.bfloat16)  # (in_dim, B_pad)

    # Kernel-side parameter layouts (tiny; one-time XLA transforms outside the kernel).
    w1 = params["w1"].astype(jnp.bfloat16)                 # (64, 5)
    w2 = params["w2"].astype(jnp.bfloat16)                 # (16, 64)
    w3 = params["w3"].astype(jnp.bfloat16)                 # (8, 16)
    w4 = params["w4"].T.astype(jnp.float32)                # (8, 1)  VPU layer, keep f32
    b1 = params["b1"].reshape(-1, 1).astype(jnp.float32)   # (64, 1)
    b2 = params["b2"].reshape(-1, 1).astype(jnp.float32)   # (16, 1)
    b3 = params["b3"].reshape(-1, 1).astype(jnp.float32)   # (8, 1)
    b4 = params["b4"].reshape(1, 1).astype(jnp.float32)    # (1, 1)

    def const(i):                       # weights/biases stay resident across grid steps
        return (0, 0)

    in_specs = [
        pl.BlockSpec((in_dim, tb), lambda i: (0, i)),      # x tile streams over the grid
        pl.BlockSpec(w1.shape, const), pl.BlockSpec(b1.shape, const),
        pl.BlockSpec(w2.shape, const), pl.BlockSpec(b2.shape, const),
        pl.BlockSpec(w3.shape, const), pl.BlockSpec(b3.shape, const),
        pl.BlockSpec(w4.shape, const), pl.BlockSpec(b4.shape, const),
    ]
    out_spec = pl.BlockSpec((1, tb), lambda i: (0, i))     # lane-dense output slab

    h1, h2, h3 = w1.shape[0], w2.shape[0], w3.shape[0]
    flops_per_row = 2 * (in_dim * h1 + h1 * h2 + h2 * h3 + h3 * 1)
    bytes_accessed = int(
        xT.size * 2 + b_pad * 4
        + (w1.size + w2.size + w3.size) * 2
        + (w4.size + b1.size + b2.size + b3.size + b4.size) * 4)

    out = pl.pallas_call(
        dqn_kernel,
        out_shape=jax.ShapeDtypeStruct((1, b_pad), jnp.float32),
        grid=(n_tiles,),
        in_specs=in_specs,
        out_specs=out_spec,
        compiler_params=pltpu.CompilerParams(
            dimension_semantics=("parallel",)),
        cost_estimate=pl.CostEstimate(
            flops=flops_per_row * b_pad,
            transcendentals=0,
            bytes_accessed=bytes_accessed),
    )(xT, w1, b1, w2, b2, w3, b3, w4, b4)

    return out[0, :B].reshape(B, 1)


def init_dqn_params(key, input_dim=5, output_dim=1, hidden_dims=(64, 16, 8)):
    """nn.Linear-style init: W (out, in), b (out,), U(-1/sqrt(fan_in), 1/sqrt(fan_in))."""
    dims = (input_dim,) + tuple(hidden_dims) + (output_dim,)
    params = {}
    for i in range(4):
        fan_in, fan_out = dims[i], dims[i + 1]
        key, kw, kb = jax.random.split(key, 3)
        bound = float(fan_in) ** -0.5
        params[f"w{i+1}"] = jax.random.uniform(
            kw, (fan_out, fan_in), jnp.float32, -bound, bound)
        params[f"b{i+1}"] = jax.random.uniform(
            kb, (fan_out,), jnp.float32, -bound, bound)
    return params


def dqn_forward_ref(x, params):
    """Plain-JAX f32 reference (matches the PyTorch forward)."""
    h = x
    for i in range(1, 4):
        h = jnp.maximum(h @ params[f"w{i}"].T + params[f"b{i}"], 0.0)
    q = h @ params["w4"].T + params["b4"]
    return q.reshape(-1, 1)


if __name__ == "__main__":
    key = jax.random.PRNGKey(0)
    key, kx = jax.random.split(key)

    B, INPUT_DIM = 8, 5
    x = jax.random.normal(kx, (B, INPUT_DIM), dtype=jnp.float32)

    params = init_dqn_params(key, input_dim=INPUT_DIM, output_dim=1,
                             hidden_dims=(64, 16, 8))

    q = dqn_forward(x, params)
    q = jax.block_until_ready(q)

    q_ref = dqn_forward_ref(x, params)
    assert q.shape == (B, 1), f"unexpected output shape {q.shape}"
    # bf16 MXU operands -> relaxed tolerance vs the f32 reference.
    assert jnp.allclose(q, q_ref, atol=2e-2, rtol=2e-2), (
        f"mismatch vs JAX reference, max abs diff {jnp.max(jnp.abs(q - q_ref))}")

    print("KERNEL_OK")
</pallas_src>

<mosaic_0001>
module attributes {stable_mosaic.version = 11 : i64} {
  func.func @dqn_kernel(%arg0: i32, %arg1: memref<5x256xbf16, #tpu.memory_space<vmem>>, %arg2: memref<64x5xbf16, #tpu.memory_space<vmem>>, %arg3: memref<64x1xf32, #tpu.memory_space<vmem>>, %arg4: memref<16x64xbf16, #tpu.memory_space<vmem>>, %arg5: memref<16x1xf32, #tpu.memory_space<vmem>>, %arg6: memref<8x16xbf16, #tpu.memory_space<vmem>>, %arg7: memref<8x1xf32, #tpu.memory_space<vmem>>, %arg8: memref<8x1xf32, #tpu.memory_space<vmem>>, %arg9: memref<1x1xf32, #tpu.memory_space<vmem>>, %arg10: memref<1x256xf32, #tpu.memory_space<vmem>>) attributes {dimension_semantics = [#tpu.dimension_semantics<parallel>], iteration_bounds = array<i64: 1>, scalar_prefetch = 0 : i64, scratch_operands = 0 : i64, tpu.core_type = #tpu.core_type<tc>, window_params = [{transform_indices = @transform_0, window_bounds = array<i64: 5, 256>}, {pipeline_mode = #tpu.pipeline_mode<synchronous>, transform_indices = @transform_1, window_bounds = array<i64: 64, 5>}, {pipeline_mode = #tpu.pipeline_mode<synchronous>, transform_indices = @transform_2, window_bounds = array<i64: 64, 1>}, {pipeline_mode = #tpu.pipeline_mode<synchronous>, transform_indices = @transform_3, window_bounds = array<i64: 16, 64>}, {pipeline_mode = #tpu.pipeline_mode<synchronous>, transform_indices = @transform_4, window_bounds = array<i64: 16, 1>}, {pipeline_mode = #tpu.pipeline_mode<synchronous>, transform_indices = @transform_5, window_bounds = array<i64: 8, 16>}, {pipeline_mode = #tpu.pipeline_mode<synchronous>, transform_indices = @transform_6, window_bounds = array<i64: 8, 1>}, {pipeline_mode = #tpu.pipeline_mode<synchronous>, transform_indices = @transform_7, window_bounds = array<i64: 8, 1>}, {pipeline_mode = #tpu.pipeline_mode<synchronous>, transform_indices = @transform_8, window_bounds = array<i64: 1, 1>}, {transform_indices = @transform_9, window_bounds = array<i64: 1, 256>}]} {
    %c0 = arith.constant 0 : index
    %c0_0 = arith.constant 0 : index
    %0 = vector.load %arg1[%c0, %c0_0] : memref<5x256xbf16, #tpu.memory_space<vmem>>, vector<5x256xbf16>
    %c0_1 = arith.constant 0 : index
    %c0_2 = arith.constant 0 : index
    %1 = vector.load %arg2[%c0_1, %c0_2] : memref<64x5xbf16, #tpu.memory_space<vmem>>, vector<64x5xbf16>
    %cst = arith.constant dense<0.000000e+00> : vector<64x256xf32>
    %2 = tpu.matmul %1, %0, %cst {dimension_numbers = #tpu.dot_dimension_numbers<[1], [0], [0], [1], [0, 0, 1, 1], [], []>} : vector<64x5xbf16>, vector<5x256xbf16>, vector<64x256xf32> -> vector<64x256xf32>
    %c0_3 = arith.constant 0 : index
    %c0_4 = arith.constant 0 : index
    %3 = vector.load %arg3[%c0_3, %c0_4] : memref<64x1xf32, #tpu.memory_space<vmem>>, vector<64x1xf32>
    %4 = vector.broadcast %3 : vector<64x1xf32> to vector<64x256xf32>
    %5 = arith.addf %2, %4 : vector<64x256xf32>
    %cst_5 = arith.constant 0.000000e+00 : f32
    %6 = vector.broadcast %cst_5 : f32 to vector<64x256xf32>
    %7 = arith.maximumf %5, %6 : vector<64x256xf32>
    %c0_6 = arith.constant 0 : index
    %c0_7 = arith.constant 0 : index
    %8 = vector.load %arg4[%c0_6, %c0_7] : memref<16x64xbf16, #tpu.memory_space<vmem>>, vector<16x64xbf16>
    %9 = arith.truncf %7 : vector<64x256xf32> to vector<64x256xbf16>
    %cst_8 = arith.constant dense<0.000000e+00> : vector<16x256xf32>
    %10 = tpu.matmul %8, %9, %cst_8 {dimension_numbers = #tpu.dot_dimension_numbers<[1], [0], [0], [1], [0, 0, 1, 1], [], []>} : vector<16x64xbf16>, vector<64x256xbf16>, vector<16x256xf32> -> vector<16x256xf32>
    %c0_9 = arith.constant 0 : index
    %c0_10 = arith.constant 0 : index
    %11 = vector.load %arg5[%c0_9, %c0_10] : memref<16x1xf32, #tpu.memory_space<vmem>>, vector<16x1xf32>
    %12 = vector.broadcast %11 : vector<16x1xf32> to vector<16x256xf32>
    %13 = arith.addf %10, %12 : vector<16x256xf32>
    %cst_11 = arith.constant 0.000000e+00 : f32
    %14 = vector.broadcast %cst_11 : f32 to vector<16x256xf32>
    %15 = arith.maximumf %13, %14 : vector<16x256xf32>
    %c0_12 = arith.constant 0 : index
    %c0_13 = arith.constant 0 : index
    %16 = vector.load %arg6[%c0_12, %c0_13] : memref<8x16xbf16, #tpu.memory_space<vmem>>, vector<8x16xbf16>
    %17 = arith.truncf %15 : vector<16x256xf32> to vector<16x256xbf16>
    %cst_14 = arith.constant dense<0.000000e+00> : vector<8x256xf32>
    %18 = tpu.matmul %16, %17, %cst_14 {dimension_numbers = #tpu.dot_dimension_numbers<[1], [0], [0], [1], [0, 0, 1, 1], [], []>} : vector<8x16xbf16>, vector<16x256xbf16>, vector<8x256xf32> -> vector<8x256xf32>
    %c0_15 = arith.constant 0 : index
    %c0_16 = arith.constant 0 : index
    %19 = vector.load %arg7[%c0_15, %c0_16] : memref<8x1xf32, #tpu.memory_space<vmem>>, vector<8x1xf32>
    %20 = vector.broadcast %19 : vector<8x1xf32> to vector<8x256xf32>
    %21 = arith.addf %18, %20 : vector<8x256xf32>
    %cst_17 = arith.constant 0.000000e+00 : f32
    %22 = vector.broadcast %cst_17 : f32 to vector<8x256xf32>
    %23 = arith.maximumf %21, %22 : vector<8x256xf32>
    %c0_18 = arith.constant 0 : index
    %c0_19 = arith.constant 0 : index
    %24 = vector.load %arg8[%c0_18, %c0_19] : memref<8x1xf32, #tpu.memory_space<vmem>>, vector<8x1xf32>
    %25 = vector.broadcast %24 : vector<8x1xf32> to vector<8x256xf32>
    %26 = arith.mulf %23, %25 : vector<8x256xf32>
    %cst_20 = arith.constant dense<0.000000e+00> : vector<256xf32>
    %27 = vector.multi_reduction <add>, %26, %cst_20 [0] : vector<8x256xf32> to vector<256xf32>
    %28 = vector.shape_cast %27 : vector<256xf32> to vector<1x256xf32>
    %c0_21 = arith.constant 0 : index
    %c0_22 = arith.constant 0 : index
    %29 = vector.load %arg9[%c0_21, %c0_22] : memref<1x1xf32, #tpu.memory_space<vmem>>, vector<1x1xf32>
    %30 = vector.broadcast %29 : vector<1x1xf32> to vector<1x256xf32>
    %31 = arith.addf %28, %30 : vector<1x256xf32>
    %c0_23 = arith.constant 0 : index
    %c0_24 = arith.constant 0 : index
    %32 = vector.load %arg10[%c0_23, %c0_24] : memref<1x256xf32, #tpu.memory_space<vmem>>, vector<1x256xf32>
    tpu.vector_store %arg10[%c0_23, %c0_24], %31 {strides = array<i32>} : memref<1x256xf32, #tpu.memory_space<vmem>>, vector<1x256xf32>,
    return
  }
  func.func @transform_0(%arg0: i32) -> (i32, i32) {
    %c0_i32 = arith.constant 0 : i32
    %c0_i32_0 = arith.constant 0 : i32
    return %c0_i32, %arg0 : i32, i32
  }
  func.func @transform_1(%arg0: i32) -> (i32, i32) {
    %c0_i32 = arith.constant 0 : i32
    %c0_i32_0 = arith.constant 0 : i32
    %c0_i32_1 = arith.constant 0 : i32
    return %c0_i32, %c0_i32_0 : i32, i32
  }
  func.func @transform_2(%arg0: i32) -> (i32, i32) {
    %c0_i32 = arith.constant 0 : i32
    %c0_i32_0 = arith.constant 0 : i32
    %c0_i32_1 = arith.constant 0 : i32
    return %c0_i32, %c0_i32_0 : i32, i32
  }
  func.func @transform_3(%arg0: i32) -> (i32, i32) {
    %c0_i32 = arith.constant 0 : i32
    %c0_i32_0 = arith.constant 0 : i32
    %c0_i32_1 = arith.constant 0 : i32
    return %c0_i32, %c0_i32_0 : i32, i32
  }
  func.func @transform_4(%arg0: i32) -> (i32, i32) {
    %c0_i32 = arith.constant 0 : i32
    %c0_i32_0 = arith.constant 0 : i32
    %c0_i32_1 = arith.constant 0 : i32
    return %c0_i32, %c0_i32_0 : i32, i32
  }
  func.func @transform_5(%arg0: i32) -> (i32, i32) {
    %c0_i32 = arith.constant 0 : i32
    %c0_i32_0 = arith.constant 0 : i32
    %c0_i32_1 = arith.constant 0 : i32
    return %c0_i32, %c0_i32_0 : i32, i32
  }
  func.func @transform_6(%arg0: i32) -> (i32, i32) {
    %c0_i32 = arith.constant 0 : i32
    %c0_i32_0 = arith.constant 0 : i32
    %c0_i32_1 = arith.constant 0 : i32
    return %c0_i32, %c0_i32_0 : i32, i32
  }
  func.func @transform_7(%arg0: i32) -> (i32, i32) {
    %c0_i32 = arith.constant 0 : i32
    %c0_i32_0 = arith.constant 0 : i32
    %c0_i32_1 = arith.constant 0 : i32
    return %c0_i32, %c0_i32_0 : i32, i32
  }
  func.func @transform_8(%arg0: i32) -> (i32, i32) {
    %c0_i32 = arith.constant 0 : i32
    %c0_i32_0 = arith.constant 0 : i32
    %c0_i32_1 = arith.constant 0 : i32
    return %c0_i32, %c0_i32_0 : i32, i32
  }
  func.func @transform_9(%arg0: i32) -> (i32, i32) {
    %c0_i32 = arith.constant 0 : i32
    %c0_i32_0 = arith.constant 0 : i32
    return %c0_i32, %arg0 : i32, i32
  }
}

</mosaic_0001>

<llo_original>
// kernel: tpu_custom_call.1
$region0: #{tpu_custom_call.1}
  #allocation0 [shape = 'u32[]', space=smem, size = 0x4, offset = 0x4, fixed_abs, tag = 'smem constant byte address 0x4 - core index']
  #allocation1 [shape = 'u32[144,128]{1,0:T(1,128)}', space=vmem, size = 0x12000, scoped, tag = 'internal scratch']
  #allocation2 [shape = 'f32[1,1]{1,0:T(1,128)S(1)}', space=vmem, size = 0x200, scoped, tag = 'scoped memory for tpu_custom_call.1']
  %s0 = inlined_call_operand.vmem [shape: bf16[5,256], index: 0, kind: input, shape index: {}]
  %s1 = inlined_call_operand.vmem [shape: bf16[64,5], index: 1, kind: input, shape index: {}]
  %s2 = inlined_call_operand.vmem [shape: f32[64,1], index: 2, kind: input, shape index: {}]
  %s3 = inlined_call_operand.vmem [shape: bf16[16,64], index: 3, kind: input, shape index: {}]
  %s4 = inlined_call_operand.vmem [shape: f32[16,1], index: 4, kind: input, shape index: {}]
  %s5 = inlined_call_operand.vmem [shape: bf16[8,16], index: 5, kind: input, shape index: {}]
  %s6 = inlined_call_operand.vmem [shape: f32[8,1], index: 6, kind: input, shape index: {}]
  %s7 = inlined_call_operand.vmem [shape: f32[8,1], index: 7, kind: input, shape index: {}]
  %s8 = inlined_call_operand.<no memory space> [shape: f32[1,1], index: 8, kind: input, shape index: {}]
  %s9 = inlined_call_operand.hbm [shape: f32[1,256], index: 9, kind: output, shape index: {}]
  %s10 = sld [smem:[#allocation0]]
  $region46: #{tpu_custom_call.1} parent=0
    _
  %s12 = ssub.s32 1, %s10
  %s13 = scalar_select 0, %s12, %s10
  %v14 = vstv %s8
  %15 = vst [vmem:[#allocation2] sm:$0x1] %v14
  $region1: #{tpu_custom_call.1} parent=0
    #allocation3 [shape = 'u8[1024]{0}', space=vmem, size = 0x400, scoped, tag = 'output window, operand 0, single buffered']
    #allocation4 [shape = 's32[1]{0}', space=sflag, size = 0x4, scoped, tag = 'scoped memory for tpu_custom_call.1']
    %16 = vsyncpa [#allocation4], 0
    // Predicated region
    $region2: #{tpu_custom_call.1} parent=1 // pred_check
      _
    $region3: #{tpu_custom_call.1} parent=1 // pred_check_branch
      %18 = sbr.rel (0) target = $region5
    $region4: #{tpu_custom_call.1} parent=1 // pred_region
      _
    $region5: #{tpu_custom_call.1} parent=1 // pred_fallthru
      _
    // Predicated region
    $region6: #{tpu_custom_call.1} parent=1 // pred_check
      _
    $region7: #{tpu_custom_call.1} parent=1 // pred_check_branch
      %20 = sbr.rel (0) target = $region9
    $region8: #{tpu_custom_call.1} parent=1 // pred_region
      _
    $region9: #{tpu_custom_call.1} parent=1 // pred_fallthru
      _
    // Predicated region
    $region10: #{tpu_custom_call.1} parent=1 // pred_check
      _
    $region11: #{tpu_custom_call.1} parent=1 // pred_check_branch
      %22 = sbr.rel (0) target = $region13
    $region12: #{tpu_custom_call.1} parent=1 // pred_region
      _
    $region13: #{tpu_custom_call.1} parent=1 // pred_fallthru
      _
    // Predicated region
    $region14: #{tpu_custom_call.1} parent=1 // pred_check
      _
    $region15: #{tpu_custom_call.1} parent=1 // pred_check_branch
      %24 = sbr.rel (0) target = $region17
    $region16: #{tpu_custom_call.1} parent=1 // pred_region
      _
    $region17: #{tpu_custom_call.1} parent=1 // pred_fallthru
      _
    // Predicated region
    $region18: #{tpu_custom_call.1} parent=1 // pred_check
      _
    $region19: #{tpu_custom_call.1} parent=1 // pred_check_branch
      %26 = sbr.rel (0) target = $region21
    $region20: #{tpu_custom_call.1} parent=1 // pred_region
      _
    $region21: #{tpu_custom_call.1} parent=1 // pred_fallthru
      _
    // Predicated region
    $region22: #{tpu_custom_call.1} parent=1 // pred_check
      _
    $region23: #{tpu_custom_call.1} parent=1 // pred_check_branch
      %28 = sbr.rel (0) target = $region25
    $region24: #{tpu_custom_call.1} parent=1 // pred_region
      _
    $region25: #{tpu_custom_call.1} parent=1 // pred_fallthru
      _
    // Predicated region
    $region26: #{tpu_custom_call.1} parent=1 // pred_check
      _
    $region27: #{tpu_custom_call.1} parent=1 // pred_check_branch
      %30 = sbr.rel (0) target = $region29
    $region28: #{tpu_custom_call.1} parent=1 // pred_region
      _
    $region29: #{tpu_custom_call.1} parent=1 // pred_fallthru
      _
    // Predicated region
    $region30: #{tpu_custom_call.1} parent=1 // pred_check
      _
    $region31: #{tpu_custom_call.1} parent=1 // pred_check_branch
      %32 = sbr.rel (0) target = $region33
    $region32: #{tpu_custom_call.1} parent=1 // pred_region
      _
    $region33: #{tpu_custom_call.1} parent=1 // pred_fallthru
      _
    // Predicated region
    $region34: #{tpu_custom_call.1} parent=1 // pred_check
      _
    $region35: #{tpu_custom_call.1} parent=1 // pred_check_branch
      %34 = sbr.rel (0) target = $region37
    $region36: #{tpu_custom_call.1} parent=1 // pred_region
      _
    $region37: #{tpu_custom_call.1} parent=1 // pred_fallthru
      _
    %v36 = vld [vmem:[%s0] sm:$0x77]
    %v37 = vld [vmem:[%s1] sm:$0xf]
    %v38 = vld [vmem:[%s1 + $0x4] sm:$0xf]
    %v39 = vld [vmem:[%s1 + $0x8] sm:$0xf]
    %v40 = vld [vmem:[%s1 + $0xc] sm:$0xf]
    %v41 = vld [vmem:[%s1 + $0x10] sm:$0xf]
    %v42 = vld [vmem:[%s1 + $0x14] sm:$0xf]
    %v43 = vld [vmem:[%s1 + $0x18] sm:$0xf]
    %v44 = vld [vmem:[%s1 + $0x1c] sm:$0xf]
    %v45 = vld [vmem:[%s2] sm:$0xff]
    %v46 = vld [vmem:[%s2 + $0x8] sm:$0xff]
    %v47 = vld [vmem:[%s2 + $0x10] sm:$0xff]
    %v48 = vld [vmem:[%s2 + $0x18] sm:$0xff]
    %v49 = vld [vmem:[%s2 + $0x20] sm:$0xff]
    %v50 = vld [vmem:[%s2 + $0x28] sm:$0xff]
    %v51 = vld [vmem:[%s2 + $0x30] sm:$0xff]
    %v52 = vld [vmem:[%s2 + $0x38] sm:$0xff]
    %54 = vset.pattern.permute.xlu0 0
    %55 = vperm.xlu0 %54, %v45
    %v56 = vpop.permute.xlu0 %55
    %59 = vset.pattern.permute.xlu0 0
    %60 = vperm.xlu0 %59, %v46
    %v61 = vpop.permute.xlu0 %60
    %64 = vset.pattern.permute.xlu0 0
    %65 = vperm.xlu0 %64, %v47
    %v66 = vpop.permute.xlu0 %65
    %69 = vset.pattern.permute.xlu0 0
    %70 = vperm.xlu0 %69, %v48
    %v71 = vpop.permute.xlu0 %70
    %74 = vset.pattern.permute.xlu0 0
    %75 = vperm.xlu0 %74, %v49
    %v76 = vpop.permute.xlu0 %75
    %79 = vset.pattern.permute.xlu0 0
    %80 = vperm.xlu0 %79, %v50
    %v81 = vpop.permute.xlu0 %80
    %84 = vset.pattern.permute.xlu0 0
    %85 = vperm.xlu0 %84, %v51
    %v86 = vpop.permute.xlu0 %85
    %89 = vset.pattern.permute.xlu0 0
    %90 = vperm.xlu0 %89, %v52
    %v91 = vpop.permute.xlu0 %90
    %v101 = vunpack.c.l.b16 %v37
    %v102 = vunpack.c.l.b16 %v38
    %v103 = vunpack.c.l.b16 %v39
    %v104 = vunpack.c.l.b16 %v40
    %v105 = vunpack.c.l.b16 %v41
    %v106 = vunpack.c.l.b16 %v42
    %v107 = vunpack.c.l.b16 %v43
    %v108 = vunpack.c.l.b16 %v44
    %v109 = vpack.c.b16 %v102, %v101
    %v110 = vpack.c.b16 %v104, %v103
    %v111 = vpack.c.b16 %v106, %v105
    %v112 = vpack.c.b16 %v108, %v107
    %v114 = vunpack.c.l.b16 %v36
    %v115 = vunpack.c.h.b16 %v36
    %v116 = vpack.c.b16 %v114, %v114
    %v117 = vpack.c.b16 %v115, %v115
    %vm118 = vcmask 39936
    %v120 = vsel %vm118, %v109, 0
    %v123 = vsel %vm118, %v110, 0
    %v126 = vsel %vm118, %v111, 0
    %v129 = vsel %vm118, %v112, 0
    %vm131 = vcmask 1041408
    %vm132 = vcmask 1042432
    %v133 = vsel %vm131, 4294967295, 65535
    %v134 = vsel %vm132, %v133, 0
    %v136 = vand.u32 %v116, %v134
    %v139 = vand.u32 %v117, %v134
    %141 = vmatprep.subr.bf16.mxu0 0
    %142 = vmatpush1.bf16.msra.mxu0 0
    %143 = vmatprep.subr.bf16.mxu0 0
    %144 = vmatpush1.bf16.msra.mxu0 0
    %145 = vmatprep.subr.bf16.mxu0 0
    %146 = vmatpush1.bf16.msra.mxu0 0
    %147 = vmatprep.subr.bf16.mxu0 0
    %148 = vmatpush1.bf16.msra.mxu0 0
    %149 = vmatprep.subr.bf16.mxu0 0
    %150 = vmatpush1.bf16.msra.mxu0 0
    %151 = vmatprep.subr.bf16.mxu0 0
    %152 = vmatpush1.bf16.msra.mxu0 0
    %153 = vmatprep.subr.bf16.mxu0 0
    %154 = vmatpush1.bf16.msra.mxu0 0
    %155 = vmatprep.subr.bf16.mxu0 %v139
    %156 = vmatpush1.bf16.msra.mxu0 %v136
    %157 = vmatprep.subr.bf16.mxu0 0
    %158 = vmatpush2.bf16.msra.mxu0 0
    %159 = vmatprep.subr.bf16.mxu0 0
    %160 = vmatpush2.bf16.msra.mxu0 0
    %161 = vmatprep.subr.bf16.mxu0 0
    %162 = vmatpush2.bf16.msra.mxu0 0
    %163 = vmatprep.subr.bf16.mxu0 0
    %164 = vmatpush2.bf16.msra.mxu0 0
    %165 = vmatprep.subr.bf16.mxu0 0
    %166 = vmatpush2.bf16.msra.mxu0 0
    %167 = vmatprep.subr.bf16.mxu0 0
    %168 = vmatpush2.bf16.msra.mxu0 0
    %169 = vmatprep.subr.bf16.mxu0 0
    %170 = vmatpush2.bf16.msra.mxu0 0
    %171 = vmatprep.subr.bf16.mxu0 0
    %172 = vmatpush2.bf16.msra.mxu0 0
    %173 = vmatprep.mubr.bf16.mxu0 0
    %174 = vmatmul.mubr.bf16.gmra.mxu0 %v120
    %v175 = vpop.f32.mrf.mxu0
    %v176 = vadd.f32 %v56, %v175
    %v177 = vpop.f32.mrf.mxu0
    %v178 = vadd.f32 %v56, %v177
    %v179 = vpop.f32.mrf.mxu0
    %v180 = vadd.f32 %v61, %v179
    %v181 = vpop.f32.mrf.mxu0
    %v182 = vadd.f32 %v61, %v181
    %183 = vmatprep.mubr.bf16.mxu0 0
    %184 = vmatmul.mubr.bf16.gmra.mxu0 %v123
    %v185 = vpop.f32.mrf.mxu0
    %v186 = vadd.f32 %v66, %v185
    %v187 = vpop.f32.mrf.mxu0
    %v188 = vadd.f32 %v66, %v187
    %v189 = vpop.f32.mrf.mxu0
    %v190 = vadd.f32 %v71, %v189
    %v191 = vpop.f32.mrf.mxu0
    %v192 = vadd.f32 %v71, %v191
    %193 = vmatprep.mubr.bf16.mxu0 0
    %194 = vmatmul.mubr.bf16.gmra.mxu0 %v126
    %v195 = vpop.f32.mrf.mxu0
    %v196 = vadd.f32 %v76, %v195
    %v197 = vpop.f32.mrf.mxu0
    %v198 = vadd.f32 %v76, %v197
    %v199 = vpop.f32.mrf.mxu0
    %v200 = vadd.f32 %v81, %v199
    %v201 = vpop.f32.mrf.mxu0
    %v202 = vadd.f32 %v81, %v201
    %203 = vmatprep.mubr.bf16.mxu0 0
    %204 = vmatmul.mubr.bf16.gmra.mxu0 %v129
    %v205 = vpop.f32.mrf.mxu0
    %v206 = vadd.f32 %v86, %v205
    %v207 = vpop.f32.mrf.mxu0
    %v208 = vadd.f32 %v86, %v207
    %v209 = vpop.f32.mrf.mxu0
    %v210 = vadd.f32 %v91, %v209
    %v211 = vpop.f32.mrf.mxu0
    %v212 = vadd.f32 %v91, %v211
    %213 = vdwg.mxu0
    %v214 = vmax.f32 %v176, 0.0
    %v215 = vmax.f32 %v178, 0.0
    %v216 = vmax.f32 %v180, 0.0
    %v217 = vmax.f32 %v182, 0.0
    %v218 = vmax.f32 %v186, 0.0
    %v219 = vmax.f32 %v188, 0.0
    %v220 = vmax.f32 %v190, 0.0
    %v221 = vmax.f32 %v192, 0.0
    %v222 = vmax.f32 %v196, 0.0
    %v223 = vmax.f32 %v198, 0.0
    %v224 = vmax.f32 %v200, 0.0
    %v225 = vmax.f32 %v202, 0.0
    %v226 = vmax.f32 %v206, 0.0
    %v227 = vmax.f32 %v208, 0.0
    %v228 = vmax.f32 %v210, 0.0
    %v229 = vmax.f32 %v212, 0.0
    %v230 = vld [vmem:[%s3] sm:$0xf]
    %v231 = vld [vmem:[%s3 + $0x4] sm:$0xf]
    %v232 = vpack.c.bf16 %v216, %v214
    %v233 = vpack.c.bf16 %v217, %v215
    %v234 = vpack.c.bf16 %v220, %v218
    %v235 = vpack.c.bf16 %v221, %v219
    %v236 = vpack.c.bf16 %v224, %v222
    %v237 = vpack.c.bf16 %v225, %v223
    %v238 = vpack.c.bf16 %v228, %v226
    %v239 = vpack.c.bf16 %v229, %v227
    %v240 = vld [vmem:[%s4] sm:$0xff]
    %v241 = vld [vmem:[%s4 + $0x8] sm:$0xff]
    %243 = vset.pattern.permute.xlu0 0
    %244 = vperm.xlu0 %243, %v240
    %v245 = vpop.permute.xlu0 %244
    %248 = vset.pattern.permute.xlu0 0
    %249 = vperm.xlu0 %248, %v241
    %v250 = vpop.permute.xlu0 %249
    %v254 = vunpack.c.l.b16 %v230
    %v255 = vunpack.c.l.b16 %v231
    %v256 = vpack.c.b16 %v255, %v254
    %vm257 = vcmask 523264
    %v259 = vsel %vm257, %v256, 0
    %261 = vmatprep.subr.bf16.mxu0 0
    %262 = vmatpush1.bf16.msra.mxu0 0
    %263 = vmatprep.subr.bf16.mxu0 0
    %264 = vmatpush1.bf16.msra.mxu0 0
    %265 = vmatprep.subr.bf16.mxu0 0
    %266 = vmatpush1.bf16.msra.mxu0 0
    %267 = vmatprep.subr.bf16.mxu0 0
    %268 = vmatpush1.bf16.msra.mxu0 0
    %269 = vmatprep.subr.bf16.mxu0 %v239
    %270 = vmatpush1.bf16.msra.mxu0 %v238
    %271 = vmatprep.subr.bf16.mxu0 %v237
    %272 = vmatpush1.bf16.msra.mxu0 %v236
    %273 = vmatprep.subr.bf16.mxu0 %v235
    %274 = vmatpush1.bf16.msra.mxu0 %v234
    %275 = vmatprep.subr.bf16.mxu0 %v233
    %276 = vmatpush1.bf16.msra.mxu0 %v232
    %277 = vmatprep.subr.bf16.mxu0 0
    %278 = vmatpush2.bf16.msra.mxu0 0
    %279 = vmatprep.subr.bf16.mxu0 0
    %280 = vmatpush2.bf16.msra.mxu0 0
    %281 = vmatprep.subr.bf16.mxu0 0
    %282 = vmatpush2.bf16.msra.mxu0 0
    %283 = vmatprep.subr.bf16.mxu0 0
    %284 = vmatpush2.bf16.msra.mxu0 0
    %285 = vmatprep.subr.bf16.mxu0 0
    %286 = vmatpush2.bf16.msra.mxu0 0
    %287 = vmatprep.subr.bf16.mxu0 0
    %288 = vmatpush2.bf16.msra.mxu0 0
    %289 = vmatprep.subr.bf16.mxu0 0
    %290 = vmatpush2.bf16.msra.mxu0 0
    %291 = vmatprep.subr.bf16.mxu0 0
    %292 = vmatpush2.bf16.msra.mxu0 0
    %293 = vmatprep.mubr.bf16.mxu0 0
    %294 = vmatmul.mubr.bf16.gmra.mxu0 %v259
    %v295 = vpop.f32.mrf.mxu0
    %v296 = vadd.f32 %v245, %v295
    %v297 = vpop.f32.mrf.mxu0
    %v298 = vadd.f32 %v245, %v297
    %v299 = vpop.f32.mrf.mxu0
    %v300 = vadd.f32 %v250, %v299
    %v301 = vpop.f32.mrf.mxu0
    %v302 = vadd.f32 %v250, %v301
    %303 = vdwg.mxu0
    %v304 = vmax.f32 %v296, 0.0
    %v305 = vmax.f32 %v298, 0.0
    %v306 = vmax.f32 %v300, 0.0
    %v307 = vmax.f32 %v302, 0.0
    %v308 = vld [vmem:[%s5] sm:$0xf]
    %v309 = vpack.c.bf16 %v306, %v304
    %v310 = vpack.c.bf16 %v307, %v305
    %v311 = vld [vmem:[%s6] sm:$0xff]
    %313 = vset.pattern.permute.xlu0 0
    %314 = vperm.xlu0 %313, %v311
    %v315 = vpop.permute.xlu0 %314
    %vm317 = vcmask 130048
    %v319 = vsel %vm317, %v308, 0
    %321 = vmatprep.subr.bf16.mxu0 0
    %322 = vmatpush1.bf16.msra.mxu0 0
    %323 = vmatprep.subr.bf16.mxu0 0
    %324 = vmatpush1.bf16.msra.mxu0 0
    %325 = vmatprep.subr.bf16.mxu0 0
    %326 = vmatpush1.bf16.msra.mxu0 0
    %327 = vmatprep.subr.bf16.mxu0 0
    %328 = vmatpush1.bf16.msra.mxu0 0
    %329 = vmatprep.subr.bf16.mxu0 0
    %330 = vmatpush1.bf16.msra.mxu0 0
    %331 = vmatprep.subr.bf16.mxu0 0
    %332 = vmatpush1.bf16.msra.mxu0 0
    %333 = vmatprep.subr.bf16.mxu0 0
    %334 = vmatpush1.bf16.msra.mxu0 0
    %335 = vmatprep.subr.bf16.mxu0 %v310
    %336 = vmatpush1.bf16.msra.mxu0 %v309
    %337 = vmatprep.subr.bf16.mxu0 0
    %338 = vmatpush2.bf16.msra.mxu0 0
    %339 = vmatprep.subr.bf16.mxu0 0
    %340 = vmatpush2.bf16.msra.mxu0 0
    %341 = vmatprep.subr.bf16.mxu0 0
    %342 = vmatpush2.bf16.msra.mxu0 0
    %343 = vmatprep.subr.bf16.mxu0 0
    %344 = vmatpush2.bf16.msra.mxu0 0
    %345 = vmatprep.subr.bf16.mxu0 0
    %346 = vmatpush2.bf16.msra.mxu0 0
    %347 = vmatprep.subr.bf16.mxu0 0
    %348 = vmatpush2.bf16.msra.mxu0 0
    %349 = vmatprep.subr.bf16.mxu0 0
    %350 = vmatpush2.bf16.msra.mxu0 0
    %351 = vmatprep.subr.bf16.mxu0 0
    %352 = vmatpush2.bf16.msra.mxu0 0
    %353 = vmatprep.mubr.bf16.mxu0 0
    %354 = vmatmul.mubr.bf16.gmra.mxu0 %v319
    %v355 = vpop.f32.mrf.mxu0
    %v356 = vadd.f32 %v315, %v355
    %v357 = vpop.f32.mrf.mxu0
    %v358 = vadd.f32 %v315, %v357
    %v359 = vpop.f32.mrf.mxu0
    %v360 = vpop.f32.mrf.mxu0
    %361 = vdwg.mxu0
    %v362 = vmax.f32 %v356, 0.0
    %v363 = vmax.f32 %v358, 0.0
    %v364 = vld [vmem:[%s7] sm:$0xff]
    %366 = vset.pattern.permute.xlu0 0
    %367 = vperm.xlu0 %366, %v364
    %v368 = vpop.permute.xlu0 %367
    %v370 = vmul.f32 %v362, %v368
    %v371 = vmul.f32 %v363, %v368
    %v372 = vrot.slane %v370, 4
    %v373 = vadd.f32 %v370, %v372
    %v374 = vrot.slane %v373, 2
    %v375 = vadd.f32 %v373, %v374
    %v376 = vrot.slane %v375, 1
    %v377 = vadd.f32 %v375, %v376
    %v378 = vrot.slane %v371, 4
    %v379 = vadd.f32 %v371, %v378
    %v380 = vrot.slane %v379, 2
    %v381 = vadd.f32 %v379, %v380
    %v382 = vrot.slane %v381, 1
    %v383 = vadd.f32 %v381, %v382
    %v384 = vld [vmem:[#allocation2] sm:$0x1]
    %386 = vset.pattern.permute.xlu0 0
    %387 = vperm.xlu0 %386, %v384
    %v388 = vpop.permute.xlu0 %387
    %v390 = vlaneseq
    %v391 = vshrl.u32 %v390, 7
    %v392 = vsub.s32 0, %v391
    %v393 = vrot.slane %v388, %v392
    %v394 = vadd.f32 %v377, %v393
    %v395 = vadd.f32 %v383, %v393
    %v398 = vcombine.low %v394, %v395
    %v400 = vunpack.c.l.s4 1966171168
    %v401 = vunpack.c.0.s8 %v400
    %v402 = vlaneseq
    %v403 = vshrl.u32 %v402, 7
    %v404 = vsub.s32 %v401, %v403
    %v405 = vrot.slane %v398, %v404
    %v407 = vunpack.c.l.s4 1966171168
    %v408 = vunpack.c.0.s8 %v407
    %v409 = vlaneseq
    %v410 = vshrl.u32 %v409, 7
    %v411 = vsub.s32 %v408, %v410
    %v412 = vrot.slane %v405, %v411
    %v414 = vlaneseq
    %vm415 = vcmp.ge.s32.totalorder %v414, 0
    %vm416 = vcmp.lt.s32.totalorder %v414, 256
    %vm417 = vmand %vm415, %vm416
    %418 = vst.msk [vmem:[#allocation3] sm:$0x3] %vm417, %v412
    // Predicated region
    $region38: #{tpu_custom_call.1} parent=1 // pred_check
      _
    $region39: #{tpu_custom_call.1} parent=1 // pred_check_branch
      %420 = sbr.rel (0) target = $region41
    $region40: #{tpu_custom_call.1} parent=1 // pred_region
      %s422 = ssub.s32 32, 32
      %423 = vsyncadd [#allocation4], %s422
      %s425 = sshll.u32 [#allocation3], 4
      %s426 = int_to_ptr.vmem [resolvable:$true] %s425
      %428 = dma.vmem_to_hbm [thread:$0]  %s426, 32, %s9, [#allocation4]
    $region41: #{tpu_custom_call.1} parent=1 // pred_fallthru
      _
    // Predicated region
    $region42: #{tpu_custom_call.1} parent=1 // pred_check
      _
    $region43: #{tpu_custom_call.1} parent=1 // pred_check_branch
      %430 = sbr.rel (0) target = $region45
    $region44: #{tpu_custom_call.1} parent=1 // pred_region
      %431 = dma.done [#allocation4], 32
    $region45: #{tpu_custom_call.1} parent=1 // pred_fallthru
      _
    %432 = vsyncpa [#allocation4], 1

</llo_original>
